<compile_context>
chip_gen: v6e
topology: v6e:2x2x1
jax: 0.10.0
libtpu: 0.0.40
codegen_flags: <defaults>
</compile_context>

<pallas_src>
import functools

import jax
import jax.numpy as jnp
from jax import lax
from jax.experimental import pallas as pl
from jax.experimental.pallas import tpu as pltpu

LN_EPS = 1e-12

# x @ W^T with W stored torch-style (out_features, in_features): contract
# x's last dim against W's last dim, so no transposed weight copy is ever
# materialized in HBM or VMEM.
# TODO(synk): confirm with pl.lower_as_mlir that Mosaic does not emit a
# per-grid-step XLU transpose of the resident weight; if it ever does,
# pre-transpose W once in the wrapper instead.
_TRANS_B_DIMS = (((1,), (1,)), ((), ()))


def _round_up(x, m):
    return ((x + m - 1) // m) * m


def _sublane(dtype):
    # Native packed sublane multiple: 8 (f32), 16 (bf16), 32 (int8/fp8).
    return max(8, 32 // jnp.dtype(dtype).itemsize)


def _vmem_limit_cap_bytes():
    cap = 64 * 1024 * 1024
    try:
        cap = int(pltpu.get_tpu_info().vmem_capacity_bytes)
    except Exception:
        pass
    if cap >= 96 * 1024 * 1024:
        return 100 * 1024 * 1024        # v5e / v6e: 128 MiB physical VMEM
    return 56 * 1024 * 1024             # v7x: 64 MiB physical, leave scratch headroom


def _plan_tiles(M, H, act_bytes, w_bytes, sublane, tm_req):
    """Pick the row tile and vmem_limit_bytes (all trace-time Python ints)."""
    limit_cap = _vmem_limit_cap_bytes()

    def vmem_est(tm):
        return (2 * 3 * tm * H * act_bytes   # x / residual / out, double-buffered
                + H * H * w_bytes            # resident weight, single-buffered
                + 3 * H * 4                  # fused bias/gamma/beta
                + 4 * tm * H * 4)            # f32 epilogue temporaries

    # Resident (H,H) weight + minimal tiles must fit VMEM.
    # TODO(synk): add a K-tiled accumulator fallback for very large hidden sizes.
    assert vmem_est(sublane) <= int(0.9 * limit_cap), (
        "hidden_size too large for a resident (H,H) weight on this chip")

    # Never larger than the (sublane-rounded) problem.
    tm = min(tm_req, _round_up(M, sublane))
    # Amortize per-step overhead further when M is large.
    if M >= 4 * tm_req:
        tm = 2 * tm_req
    # Keep >= 2 grid steps so both TensorCores get work on v7x
    # (negligible extra step cost on single-TC v5e/v6e).
    if M >= 2 * sublane:
        tm = min(tm, _round_up(pl.cdiv(M, 2), sublane))
    tm = max(sublane, _round_up(tm, sublane))

    # Shrink until buffers fit within the VMEM budget with headroom.
    while tm > sublane and vmem_est(tm) > int(0.75 * limit_cap):
        tm = max(sublane, _round_up(tm // 2, sublane))

    vmem_limit = int(min(limit_cap, max(32 * 1024 * 1024, 2 * vmem_est(tm))))
    return tm, vmem_limit


def bert_cross_output_kernel(x_ref, res_ref, w_ref, p_ref, o_ref):
    # x_ref:   (TM, H) hidden_states row tile (native/bf16 dtype, fed to MXU)
    # res_ref: (TM, H) residual row tile
    # w_ref:   (H, H)  dense weight, torch (out, in) layout; constant index_map,
    #                  single-buffered -> DMA'd once, resident across the grid
    # p_ref:   (3, H)  fused params: row 0 = dense bias, row 1 = gamma, row 2 = beta
    # o_ref:   (TM, H) output tile

    # True-f32 MXU path for f32 inputs (parity with PyTorch); native single-pass
    # for bf16 inputs.  f32 accumulation either way.
    prec = (lax.Precision.HIGHEST if x_ref.dtype == jnp.float32
            else lax.Precision.DEFAULT)
    h = lax.dot_general(
        x_ref[...], w_ref[...],
        dimension_numbers=_TRANS_B_DIMS,
        preferred_element_type=jnp.float32,
        precision=prec,
    )

    params = p_ref[...].astype(jnp.float32)             # (3, H)
    bias = params[0:1, :]
    gamma = params[1:2, :]
    beta = params[2:3, :]

    # Dropout in eval mode is identity; add bias + residual in f32.
    h = h + bias + res_ref[...].astype(jnp.float32)

    # Two-pass LayerNorm over the hidden dim (matches PyTorch numerics).
    mu = jnp.mean(h, axis=-1, keepdims=True)
    c = h - mu
    var = jnp.mean(c * c, axis=-1, keepdims=True)
    normed = c * lax.rsqrt(var + LN_EPS)
    o_ref[...] = (normed * gamma + beta).astype(o_ref.dtype)


@functools.partial(jax.jit, static_argnames=("tm", "matmul_bf16"))
def bert_cross_output(hidden_states, input_tensor, weight, bias, gamma, beta,
                      *, tm=512, matmul_bf16=False):
    """hidden_states, input_tensor: (B, S, H). weight: (H, H) torch-style (out, in)."""
    B, S, H = hidden_states.shape
    M = B * S
    x2d = hidden_states.reshape(M, H)
    r2d = input_tensor.reshape(M, H)
    if matmul_bf16:
        # Perf path: bf16 matmul operands (half the DMA bytes, native MXU rate);
        # LN epilogue and residual stay f32.
        x2d = x2d.astype(jnp.bfloat16)
        weight = weight.astype(jnp.bfloat16)
    params = jnp.stack([bias, gamma, beta]).astype(jnp.float32)    # (3, H)

    sublane = max(_sublane(x2d.dtype), _sublane(r2d.dtype))
    act_bytes = max(x2d.dtype.itemsize, r2d.dtype.itemsize)
    w_bytes = weight.dtype.itemsize
    tm_eff, vmem_limit = _plan_tiles(M, H, act_bytes, w_bytes, sublane, tm)

    cost = pl.CostEstimate(
        flops=2 * M * H * H + 10 * M * H,
        transcendentals=M,
        bytes_accessed=3 * M * H * act_bytes + H * H * w_bytes + 3 * H * 4,
    )

    out = pl.pallas_call(
        bert_cross_output_kernel,
        out_shape=jax.ShapeDtypeStruct((M, H), hidden_states.dtype),
        grid_spec=pltpu.PrefetchScalarGridSpec(
            num_scalar_prefetch=0,
            grid=(pl.cdiv(M, tm_eff),),
            in_specs=[
                pl.BlockSpec((tm_eff, H), lambda i: (i, 0)),   # x row tile
                pl.BlockSpec((tm_eff, H), lambda i: (i, 0)),   # residual row tile
                pl.BlockSpec((H, H), lambda i: (0, 0),          # weight (constant,
                             pipeline_mode=pl.Buffered(1)),     #  single-buffered)
                pl.BlockSpec((3, H), lambda i: (0, 0),          # fused bias/gamma/beta
                             pipeline_mode=pl.Buffered(1)),
            ],
            out_specs=pl.BlockSpec((tm_eff, H), lambda i: (i, 0)),
        ),
        compiler_params=pltpu.CompilerParams(
            dimension_semantics=("parallel",),
            vmem_limit_bytes=vmem_limit,
        ),
        cost_estimate=cost,
    )(x2d, r2d, weight, params)
    return out.reshape(B, S, H)


def reference(hidden_states, input_tensor, weight, bias, gamma, beta):
    h = jnp.einsum("bsh,oh->bso", hidden_states, weight,
                   precision=lax.Precision.HIGHEST) + bias
    h = h + input_tensor
    mu = jnp.mean(h, axis=-1, keepdims=True)
    var = jnp.mean((h - mu) ** 2, axis=-1, keepdims=True)
    return (h - mu) / jnp.sqrt(var + LN_EPS) * gamma + beta


if __name__ == "__main__":
    B, S, H = 2, 8, 128  # batch, seq, hidden_size

    key = jax.random.PRNGKey(0)
    k1, k2, k3, k4 = jax.random.split(key, 4)
    hidden_states = jax.random.normal(k1, (B, S, H), dtype=jnp.float32)
    input_tensor = jax.random.normal(k2, (B, S, H), dtype=jnp.float32)
    # nn.Linear(H, H): weight (out, in), bias (out,)
    weight = jax.random.normal(k3, (H, H), dtype=jnp.float32) * 0.02
    bias = jax.random.normal(k4, (H,), dtype=jnp.float32) * 0.02
    # BertLayerNorm params
    gamma = jnp.ones((H,), dtype=jnp.float32)
    beta = jnp.zeros((H,), dtype=jnp.float32)

    out = bert_cross_output(hidden_states, input_tensor, weight, bias, gamma, beta)
    jax.block_until_ready(out)

    ref = reference(hidden_states, input_tensor, weight, bias, gamma, beta)
    assert out.shape == (B, S, H)
    assert jnp.allclose(out, ref, atol=1e-4, rtol=1e-4), "mismatch vs reference"

    print("KERNEL_OK")
</pallas_src>

<mosaic_0001>
module attributes {stable_mosaic.version = 11 : i64} {
  func.func @bert_cross_output_kernel(%arg0: i32, %arg1: memref<8x128xf32, #tpu.memory_space<vmem>>, %arg2: memref<8x128xf32, #tpu.memory_space<vmem>>, %arg3: memref<128x128xf32, #tpu.memory_space<vmem>>, %arg4: memref<3x128xf32, #tpu.memory_space<vmem>>, %arg5: memref<8x128xf32, #tpu.memory_space<vmem>>) attributes {dimension_semantics = [#tpu.dimension_semantics<parallel>], iteration_bounds = array<i64: 2>, scalar_prefetch = 0 : i64, scratch_operands = 0 : i64, tpu.core_type = #tpu.core_type<tc>, window_params = [{transform_indices = @transform_0, window_bounds = array<i64: 8, 128>}, {transform_indices = @transform_1, window_bounds = array<i64: 8, 128>}, {pipeline_mode = #tpu.pipeline_mode<synchronous>, transform_indices = @transform_2, window_bounds = array<i64: 128, 128>}, {pipeline_mode = #tpu.pipeline_mode<synchronous>, transform_indices = @transform_3, window_bounds = array<i64: 3, 128>}, {transform_indices = @transform_4, window_bounds = array<i64: 8, 128>}]} {
    %c0 = arith.constant 0 : index
    %c0_0 = arith.constant 0 : index
    %0 = vector.load %arg1[%c0, %c0_0] : memref<8x128xf32, #tpu.memory_space<vmem>>, vector<8x128xf32>
    %c0_1 = arith.constant 0 : index
    %c0_2 = arith.constant 0 : index
    %1 = vector.load %arg3[%c0_1, %c0_2] : memref<128x128xf32, #tpu.memory_space<vmem>>, vector<128x128xf32>
    %cst = arith.constant dense<0.000000e+00> : vector<8x128xf32>
    %2 = tpu.matmul %0, %1, %cst {dimension_numbers = #tpu.dot_dimension_numbers<[1], [1], [0], [0], [0, 0, 1, 0], [], []>, precision = #tpu.contract_precision<fp32>} : vector<8x128xf32>, vector<128x128xf32>, vector<8x128xf32> -> vector<8x128xf32>
    %c0_3 = arith.constant 0 : index
    %c0_4 = arith.constant 0 : index
    %3 = vector.load %arg4[%c0_3, %c0_4] : memref<3x128xf32, #tpu.memory_space<vmem>>, vector<3x128xf32>
    %4 = vector.extract_strided_slice %3 {offsets = [0, 0], sizes = [1, 128], strides = [1, 1]} : vector<3x128xf32> to vector<1x128xf32>
    %5 = vector.extract_strided_slice %3 {offsets = [1, 0], sizes = [1, 128], strides = [1, 1]} : vector<3x128xf32> to vector<1x128xf32>
    %6 = vector.extract_strided_slice %3 {offsets = [2, 0], sizes = [1, 128], strides = [1, 1]} : vector<3x128xf32> to vector<1x128xf32>
    %7 = vector.broadcast %4 : vector<1x128xf32> to vector<8x128xf32>
    %8 = arith.addf %2, %7 : vector<8x128xf32>
    %c0_5 = arith.constant 0 : index
    %c0_6 = arith.constant 0 : index
    %9 = vector.load %arg2[%c0_5, %c0_6] : memref<8x128xf32, #tpu.memory_space<vmem>>, vector<8x128xf32>
    %10 = arith.addf %8, %9 : vector<8x128xf32>
    %cst_7 = arith.constant dense<0.000000e+00> : vector<8xf32>
    %11 = vector.multi_reduction <add>, %10, %cst_7 [1] : vector<8x128xf32> to vector<8xf32>
    %12 = vector.shape_cast %11 : vector<8xf32> to vector<8x1xf32>
    %cst_8 = arith.constant 1.280000e+02 : f32
    %13 = vector.broadcast %cst_8 : f32 to vector<8x1xf32>
    %14 = arith.divf %12, %13 : vector<8x1xf32>
    %15 = vector.broadcast %14 : vector<8x1xf32> to vector<8x128xf32>
    %16 = arith.subf %10, %15 : vector<8x128xf32>
    %17 = arith.mulf %16, %16 : vector<8x128xf32>
    %cst_9 = arith.constant dense<0.000000e+00> : vector<8xf32>
    %18 = vector.multi_reduction <add>, %17, %cst_9 [1] : vector<8x128xf32> to vector<8xf32>
    %19 = vector.shape_cast %18 : vector<8xf32> to vector<8x1xf32>
    %cst_10 = arith.constant 1.280000e+02 : f32
    %20 = vector.broadcast %cst_10 : f32 to vector<8x1xf32>
    %21 = arith.divf %19, %20 : vector<8x1xf32>
    %cst_11 = arith.constant 9.99999996E-13 : f32
    %22 = vector.broadcast %cst_11 : f32 to vector<8x1xf32>
    %23 = arith.addf %21, %22 : vector<8x1xf32>
    %24 = math.rsqrt %23 : vector<8x1xf32>
    %25 = vector.broadcast %24 : vector<8x1xf32> to vector<8x128xf32>
    %26 = arith.mulf %16, %25 : vector<8x128xf32>
    %27 = vector.broadcast %5 : vector<1x128xf32> to vector<8x128xf32>
    %28 = arith.mulf %26, %27 : vector<8x128xf32>
    %29 = vector.broadcast %6 : vector<1x128xf32> to vector<8x128xf32>
    %30 = arith.addf %28, %29 : vector<8x128xf32>
    %c0_12 = arith.constant 0 : index
    %c0_13 = arith.constant 0 : index
    %31 = vector.load %arg5[%c0_12, %c0_13] : memref<8x128xf32, #tpu.memory_space<vmem>>, vector<8x128xf32>
    tpu.vector_store %arg5[%c0_12, %c0_13], %30 {strides = array<i32>} : memref<8x128xf32, #tpu.memory_space<vmem>>, vector<8x128xf32>,
    return
  }
  func.func @transform_0(%arg0: i32) -> (i32, i32) {
    %c0_i32 = arith.constant 0 : i32
    %c0_i32_0 = arith.constant 0 : i32
    return %arg0, %c0_i32 : i32, i32
  }
  func.func @transform_1(%arg0: i32) -> (i32, i32) {
    %c0_i32 = arith.constant 0 : i32
    %c0_i32_0 = arith.constant 0 : i32
    return %arg0, %c0_i32 : i32, i32
  }
  func.func @transform_2(%arg0: i32) -> (i32, i32) {
    %c0_i32 = arith.constant 0 : i32
    %c0_i32_0 = arith.constant 0 : i32
    %c0_i32_1 = arith.constant 0 : i32
    return %c0_i32, %c0_i32_0 : i32, i32
  }
  func.func @transform_3(%arg0: i32) -> (i32, i32) {
    %c0_i32 = arith.constant 0 : i32
    %c0_i32_0 = arith.constant 0 : i32
    %c0_i32_1 = arith.constant 0 : i32
    return %c0_i32, %c0_i32_0 : i32, i32
  }
  func.func @transform_4(%arg0: i32) -> (i32, i32) {
    %c0_i32 = arith.constant 0 : i32
    %c0_i32_0 = arith.constant 0 : i32
    return %arg0, %c0_i32 : i32, i32
  }
}

</mosaic_0001>

<llo_original>
// kernel: bert_cross_output.1
$region0: #{bert_cross_output.1}
  #allocation0 [shape = 'u32[]', space=smem, size = 0x4, offset = 0x4, fixed_abs, tag = 'smem constant byte address 0x4 - core index']
  #allocation1 [shape = 'u32[144,128]{1,0:T(1,128)}', space=vmem, size = 0x12000, scoped, tag = 'internal scratch']
  %s0 = inlined_call_operand.vmem [shape: f32[16,128], index: 0, kind: input, shape index: {}]
  %s1 = inlined_call_operand.hbm [shape: f32[16,128], index: 1, kind: input, shape index: {}]
  %s2 = inlined_call_operand.hbm [shape: f32[128,128], index: 2, kind: input, shape index: {}]
  %s3 = inlined_call_operand.vmem [shape: f32[3,128], index: 3, kind: input, shape index: {}]
  %s4 = inlined_call_operand.hbm [shape: f32[16,128], index: 4, kind: output, shape index: {}]
  %s5 = sld [smem:[#allocation0]]
  $region57: #{bert_cross_output.1} parent=0
    _
  %s7 = ssub.s32 1, %s5
  %s8 = scalar_select 0, %s7, %s5
  $region1: #{bert_cross_output.1} parent=0
    #allocation2 [shape = 'u8[8192]{0}', space=vmem, size = 0x2000, scoped, tag = 'input window, operand 1']
    #allocation3 [shape = 's32[2]{0}', space=sflag, size = 0x8, scoped, tag = 'scoped memory for bert_cross_output.1']
    #allocation4 [shape = 's32[2]{0}', space=sflag, size = 0x8, scoped, tag = 'scoped memory for bert_cross_output.1']
    #allocation5 [shape = 'u8[65536]{0}', space=vmem, size = 0x10000, scoped, tag = 'input window, operand 2, single buffered']
    #allocation6 [shape = 's32[1]{0}', space=sflag, size = 0x4, scoped, tag = 'scoped memory for bert_cross_output.1']
    #allocation7 [shape = 'u8[8192]{0}', space=vmem, size = 0x2000, scoped, tag = 'output window, operand 0']
    %9 = vsyncpa [#allocation3], 0
    %s10 = scalar_lea.sflag [#allocation3], 1
    %11 = vsyncpa %s10, 0
    %12 = vsyncpa [#allocation6], 0
    %13 = vsyncpa [#allocation4], 0
    %s14 = scalar_lea.sflag [#allocation4], 1
    %15 = vsyncpa %s14, 0
    loop: start=0, step=1, limit=4
    $region2: #{bert_cross_output.1} parent=1 // loop_pre_header
      _
    $region3: #{bert_cross_output.1} parent=1 // loop_header
      %s17 = sphi 0, %s21
      %p18 = scmp.ge.s32.totalorder %s17, 4
      %s27 = sphi 0, %s29
      %s30 = sphi 0, %s27
      %s31 = sphi 0, %s30
      %s47 = sphi 0, %s31
      %s53 = sphi 0, %s55
      %s56 = sphi 0, %s53
      %s57 = sphi 0, %s56
      %s73 = sphi 0, %s57
      %s77 = sphi 0, %s77
      %s79 = sphi 0, %s77
      %s80 = sphi 0, %s79
      %s94 = sphi 0, %s80
      %s98 = sphi 0, %s98
      %s100 = sphi 0, %s98
      %s101 = sphi 0, %s100
      %s115 = sphi 0, %s101
      %s121 = sphi 0, %s123
      %s124 = sphi 0, %s121
      %s125 = sphi 0, %s124
      %s141 = sphi 0, %s125
    $region4: #{bert_cross_output.1} parent=1 // loop_header_branch
      %20 = sbr.rel (%p18) target = $region8
    $region5: #{bert_cross_output.1} parent=1 // loop_body
      %s22 = ssub.s32 %s17, 1
      %s23 = ssub.s32 %s17, 2
      %s24 = sadd.s32 %s17, 1
      %s25 = ssub.s32 %s17, %s24
      %p26 = scmp.eq.s32.totalorder %s25, 0
      %s28 = sadd.s32 %s27, 1
      %s29 = scalar_select %p26, %s27, %s28
      %p32 = pneg %p26
      %p33 = scmp.eq.s32.totalorder %s17, 1
      %p34 = por %p32, %p33
      %p35 = scmp.ne.s32.totalorder %s27, %s30
      %p36 = scmp.eq.s32.totalorder %s17, 0
      %p37 = por %p35, %p36
      %p38 = scmp.ne.s32.totalorder %s27, %s30
      %p39 = scmp.eq.s32.totalorder %s22, 1
      %p40 = por %p38, %p39
      %p41 = scmp.ne.s32.totalorder %s30, %s31
      %p42 = scmp.eq.s32.totalorder %s22, 0
      %p43 = por %p41, %p42
      %p44 = scmp.ne.s32.totalorder %s30, %s31
      %p45 = scmp.eq.s32.totalorder %s23, 1
      %p46 = por %p44, %p45
      %p48 = scmp.ne.s32.totalorder %s31, %s47
      %p49 = scmp.eq.s32.totalorder %s23, 0
      %p50 = por %p48, %p49
      %s51 = ssub.s32 %s17, %s24
      %p52 = scmp.eq.s32.totalorder %s51, 0
      %s54 = sadd.s32 %s53, 1
      %s55 = scalar_select %p52, %s53, %s54
      %p58 = pneg %p52
      %p59 = scmp.eq.s32.totalorder %s17, 1
      %p60 = por %p58, %p59
      %p61 = scmp.ne.s32.totalorder %s53, %s56
      %p62 = scmp.eq.s32.totalorder %s17, 0
      %p63 = por %p61, %p62
      %p64 = scmp.ne.s32.totalorder %s53, %s56
      %p65 = scmp.eq.s32.totalorder %s22, 1
      %p66 = por %p64, %p65
      %p67 = scmp.ne.s32.totalorder %s56, %s57
      %p68 = scmp.eq.s32.totalorder %s22, 0
      %p69 = por %p67, %p68
      %p70 = scmp.ne.s32.totalorder %s56, %s57
      %p71 = scmp.eq.s32.totalorder %s23, 1
      %p72 = por %p70, %p71
      %p74 = scmp.ne.s32.totalorder %s57, %s73
      %p75 = scmp.eq.s32.totalorder %s23, 0
      %p76 = por %p74, %p75
      %s78 = sadd.s32 %s77, 1
      %p81 = scmp.eq.s32.totalorder %s17, 1
      %p82 = scmp.ne.s32.totalorder %s77, %s79
      %p83 = scmp.eq.s32.totalorder %s17, 0
      %p84 = por %p82, %p83
      %p85 = scmp.ne.s32.totalorder %s77, %s79
      %p86 = scmp.eq.s32.totalorder %s22, 1
      %p87 = por %p85, %p86
      %p88 = scmp.ne.s32.totalorder %s79, %s80
      %p89 = scmp.eq.s32.totalorder %s22, 0
      %p90 = por %p88, %p89
      %p91 = scmp.ne.s32.totalorder %s79, %s80
      %p92 = scmp.eq.s32.totalorder %s23, 1
      %p93 = por %p91, %p92
      %p95 = scmp.ne.s32.totalorder %s80, %s94
      %p96 = scmp.eq.s32.totalorder %s23, 0
      %p97 = por %p95, %p96
      %s99 = sadd.s32 %s98, 1
      %p102 = scmp.eq.s32.totalorder %s17, 1
      %p103 = scmp.ne.s32.totalorder %s98, %s100
      %p104 = scmp.eq.s32.totalorder %s17, 0
      %p105 = por %p103, %p104
      %p106 = scmp.ne.s32.totalorder %s98, %s100
      %p107 = scmp.eq.s32.totalorder %s22, 1
      %p108 = por %p106, %p107
      %p109 = scmp.ne.s32.totalorder %s100, %s101
      %p110 = scmp.eq.s32.totalorder %s22, 0
      %p111 = por %p109, %p110
      %p112 = scmp.ne.s32.totalorder %s100, %s101
      %p113 = scmp.eq.s32.totalorder %s23, 1
      %p114 = por %p112, %p113
      %p116 = scmp.ne.s32.totalorder %s101, %s115
      %p117 = scmp.eq.s32.totalorder %s23, 0
      %p118 = por %p116, %p117
      %s119 = ssub.s32 %s17, %s24
      %p120 = scmp.eq.s32.totalorder %s119, 0
      %s122 = sadd.s32 %s121, 1
      %s123 = scalar_select %p120, %s121, %s122
      %p126 = pneg %p120
      %p127 = scmp.eq.s32.totalorder %s17, 1
      %p128 = por %p126, %p127
      %p129 = scmp.ne.s32.totalorder %s121, %s124
      %p130 = scmp.eq.s32.totalorder %s17, 0
      %p131 = por %p129, %p130
      %p132 = scmp.ne.s32.totalorder %s121, %s124
      %p133 = scmp.eq.s32.totalorder %s22, 1
      %p134 = por %p132, %p133
      %p135 = scmp.ne.s32.totalorder %s124, %s125
      %p136 = scmp.eq.s32.totalorder %s22, 0
      %p137 = por %p135, %p136
      %p138 = scmp.ne.s32.totalorder %s124, %s125
      %p139 = scmp.eq.s32.totalorder %s23, 1
      %p140 = por %p138, %p139
      %p142 = scmp.ne.s32.totalorder %s125, %s141
      %p143 = scmp.eq.s32.totalorder %s23, 0
      %p144 = por %p142, %p143
      %p145 = scmp.le.s32.totalorder 1, %s17
      %p146 = scmp.lt.s32.totalorder %s17, 3
      %p147 = pnand %p145, %p146
      %p148 = pneg %p147
      // Predicated region
      $region9: #{bert_cross_output.1} parent=5 // pred_check
        _
      $region10: #{bert_cross_output.1} parent=5 // pred_check_branch
        %150 = sbr.rel (%p147) target = $region12
      $region11: #{bert_cross_output.1} parent=5 // pred_region
        %s151 = ssub.s32 %s17, 1
        // Predicated region
        $region13: #{bert_cross_output.1} parent=11 // pred_check
          %p152 = pneg %p90
        $region14: #{bert_cross_output.1} parent=11 // pred_check_branch
          %154 = sbr.rel (%p152) target = $region16
        $region15: #{bert_cross_output.1} parent=11 // pred_region
          %s156 = ssub.s32 2048, 2048
          %157 = vsyncadd [#allocation6], %s156
          %s158 = sshll.u32 [#allocation5], 4
          %s159 = int_to_ptr.vmem [resolvable:$true] %s158
          %164 = dma.hbm_to_vmem [thread:$0]  %s2, 2048, %s159, [#allocation6], 128, 128, 8
        $region16: #{bert_cross_output.1} parent=11 // pred_fallthru
          _
        // Predicated region
        $region17: #{bert_cross_output.1} parent=11 // pred_check
          %p165 = pneg %p111
        $region18: #{bert_cross_output.1} parent=11 // pred_check_branch
          %167 = sbr.rel (%p165) target = $region20
        $region19: #{bert_cross_output.1} parent=11 // pred_region
          _
        $region20: #{bert_cross_output.1} parent=11 // pred_fallthru
          _
      $region12: #{bert_cross_output.1} parent=5 // pred_fallthru
        _
      %p168 = scmp.lt.s32.totalorder %s17, 2
      // Predicated region
      $region21: #{bert_cross_output.1} parent=5 // pred_check
        %p169 = pneg %p168
      $region22: #{bert_cross_output.1} parent=5 // pred_check_branch
        %171 = sbr.rel (%p169) target = $region24
      $region23: #{bert_cross_output.1} parent=5 // pred_region
        // Predicated region
        $region25: #{bert_cross_output.1} parent=23 // pred_check
          %p172 = pneg %p37
        $region26: #{bert_cross_output.1} parent=23 // pred_check_branch
          %174 = sbr.rel (%p172) target = $region28
        $region27: #{bert_cross_output.1} parent=23 // pred_region
          %p175 = scmp.lt.s32.totalorder %s17, 1
          %s176 = scalar_select %p175, %s17, 1
          %s177 = smul.addr %s176, 8
          %s178 = scalar_lea.vmem %s0, %s177
        $region28: #{bert_cross_output.1} parent=23 // pred_fallthru
          _
        // Predicated region
        $region29: #{bert_cross_output.1} parent=23 // pred_check
          %p179 = pneg %p63
        $region30: #{bert_cross_output.1} parent=23 // pred_check_branch
          %181 = sbr.rel (%p179) target = $region32
        $region31: #{bert_cross_output.1} parent=23 // pred_region
          %s182 = sand.u32 %s53, 1
          %s183 = scalar_lea.sflag [#allocation3], %s182
          %s184 = sand.u32 %s53, 1
          %s185 = smul.addr %s184, 8
          %s186 = scalar_lea.vmem [#allocation2], %s185
          %s188 = ssub.s32 128, 128
          %189 = vsyncadd %s183, %s188
          %s190 = smul.addr %s17, 128
          %s191 = scalar_lea.hbm %s1, %s190
          %s193 = sshll.u32 %s186, 4
          %s194 = int_to_ptr.vmem [resolvable:$true] %s193
          %196 = dma.hbm_to_vmem [thread:$0]  %s191, 128, %s194, %s183
        $region32: #{bert_cross_output.1} parent=23 // pred_fallthru
          _
      $region24: #{bert_cross_output.1} parent=5 // pred_fallthru
        _
      %p197 = scmp.le.s32.totalorder 1, %s17
      %p198 = scmp.lt.s32.totalorder %s17, 3
      %p199 = pnand %p197, %p198
      %p200 = pneg %p199
      // Predicated region
      $region33: #{bert_cross_output.1} parent=5 // pred_check
        _
      $region34: #{bert_cross_output.1} parent=5 // pred_check_branch
        %202 = sbr.rel (%p199) target = $region36
      $region35: #{bert_cross_output.1} parent=5 // pred_region
        %s203 = ssub.s32 %s17, 1
        %s204 = sand.u32 %s56, 1
        %s205 = scalar_lea.sflag [#allocation3], %s204
        %s206 = sand.u32 %s56, 1
        %s207 = smul.addr %s206, 8
        %s208 = scalar_lea.vmem [#allocation2], %s207
        // Predicated region
        $region37: #{bert_cross_output.1} parent=35 // pred_check
          %p209 = pneg %p69
        $region38: #{bert_cross_output.1} parent=35 // pred_check_branch
          %211 = sbr.rel (%p209) target = $region40
        $region39: #{bert_cross_output.1} parent=35 // pred_region
          %212 = dma.done %s205, 128
        $region40: #{bert_cross_output.1} parent=35 // pred_fallthru
          _
        // Predicated region
        $region41: #{bert_cross_output.1} parent=35 // pred_check
          %p213 = pneg %p90
        $region42: #{bert_cross_output.1} parent=35 // pred_check_branch
          %215 = sbr.rel (%p213) target = $region44
        $region43: #{bert_cross_output.1} parent=35 // pred_region
          %216 = dma.done [#allocation6], 2048
        $region44: #{bert_cross_output.1} parent=35 // pred_fallthru
          _
        %p217 = scmp.lt.s32.totalorder %s22, 1
        %s218 = scalar_select %p217, %s22, 1
        %s219 = smul.addr %s218, 8
        %s220 = scalar_lea.vmem %s0, %s219
        %p221 = pneg %p43
        %p222 = pneg %p40
        %s223 = sand.u32 %s56, 1
        %s224 = scalar_lea.sflag [#allocation3], %s223
        %s225 = sand.u32 %s56, 1
        %s226 = smul.addr %s225, 8
        %s227 = scalar_lea.vmem [#allocation2], %s226
        %p228 = pneg %p69
        %p229 = pneg %p66
        %p230 = pneg %p90
        %p231 = pneg %p87
        %p232 = pneg %p111
        %p233 = pneg %p108
        %p234 = pneg %p137
        %p235 = pneg %p134
        %s236 = sand.u32 %s124, 1
        %s237 = scalar_lea.sflag [#allocation4], %s236
        %s238 = sand.u32 %s124, 1
        %s239 = smul.addr %s238, 8
        %s240 = scalar_lea.vmem [#allocation7], %s239
        %p241 = scmp.lt.s32.totalorder %s22, 1
        %s242 = scalar_select %p241, %s22, 1
        %s243 = smul.addr %s242, 8
        %s244 = scalar_lea.vmem %s0, %s243
        %v245 = vld [vmem:[%s244] sm:$0xff]
        %v246 = vld [vmem:[#allocation5] sm:$0xff]
        %v247 = vld [vmem:[#allocation5 + $0x8] sm:$0xff]
        %v248 = vld [vmem:[#allocation5 + $0x10] sm:$0xff]
        %v249 = vld [vmem:[#allocation5 + $0x18] sm:$0xff]
        %v250 = vld [vmem:[#allocation5 + $0x20] sm:$0xff]
        %v251 = vld [vmem:[#allocation5 + $0x28] sm:$0xff]
        %v252 = vld [vmem:[#allocation5 + $0x30] sm:$0xff]
        %v253 = vld [vmem:[#allocation5 + $0x38] sm:$0xff]
        %v254 = vld [vmem:[#allocation5 + $0x40] sm:$0xff]
        %v255 = vld [vmem:[#allocation5 + $0x48] sm:$0xff]
        %v256 = vld [vmem:[#allocation5 + $0x50] sm:$0xff]
        %v257 = vld [vmem:[#allocation5 + $0x58] sm:$0xff]
        %v258 = vld [vmem:[#allocation5 + $0x60] sm:$0xff]
        %v259 = vld [vmem:[#allocation5 + $0x68] sm:$0xff]
        %v260 = vld [vmem:[#allocation5 + $0x70] sm:$0xff]
        %v261 = vld [vmem:[#allocation5 + $0x78] sm:$0xff]
        %v262 = vld [vmem:[%s3] sm:$0x7]
        %v263 = vlaneseq
        %v264 = vshrl.u32 %v263, 7
        %v265 = vsub.s32 0, %v264
        %v266 = vrot.slane %v262, %v265
        %267 = vmatprep.subr.mxu0 0.0
        %v268 = vand.u32 %v261, 4294901760
        %269 = vmatpush1.xpose.msra.mxu0 %v268
        %270 = vmatprep.subr.mxu0 0.0
        %v271 = vand.u32 %v260, 4294901760
        %272 = vmatpush1.xpose.msra.mxu0 %v271
        %273 = vmatprep.subr.mxu0 0.0
        %v274 = vand.u32 %v259, 4294901760
        %275 = vmatpush1.xpose.msra.mxu0 %v274
        %276 = vmatprep.subr.mxu0 0.0
        %v277 = vand.u32 %v258, 4294901760
        %278 = vmatpush1.xpose.msra.mxu0 %v277
        %279 = vmatprep.subr.mxu0 0.0
        %v280 = vand.u32 %v257, 4294901760
        %281 = vmatpush1.xpose.msra.mxu0 %v280
        %282 = vmatprep.subr.mxu0 0.0
        %v283 = vand.u32 %v256, 4294901760
        %284 = vmatpush1.xpose.msra.mxu0 %v283
        %285 = vmatprep.subr.mxu0 0.0
        %v286 = vand.u32 %v255, 4294901760
        %287 = vmatpush1.xpose.msra.mxu0 %v286
        %288 = vmatprep.subr.mxu0 0.0
        %v289 = vand.u32 %v254, 4294901760
        %290 = vmatpush1.xpose.msra.mxu0 %v289
        %291 = vmatprep.subr.mxu0 0.0
        %v292 = vand.u32 %v253, 4294901760
        %293 = vmatpush1.xpose.msra.mxu0 %v292
        %294 = vmatprep.subr.mxu0 0.0
        %v295 = vand.u32 %v252, 4294901760
        %296 = vmatpush1.xpose.msra.mxu0 %v295
        %297 = vmatprep.subr.mxu0 0.0
        %v298 = vand.u32 %v251, 4294901760
        %299 = vmatpush1.xpose.msra.mxu0 %v298
        %300 = vmatprep.subr.mxu0 0.0
        %v301 = vand.u32 %v250, 4294901760
        %302 = vmatpush1.xpose.msra.mxu0 %v301
        %303 = vmatprep.subr.mxu0 0.0
        %v304 = vand.u32 %v249, 4294901760
        %305 = vmatpush1.xpose.msra.mxu0 %v304
        %306 = vmatprep.subr.mxu0 0.0
        %v307 = vand.u32 %v248, 4294901760
        %308 = vmatpush1.xpose.msra.mxu0 %v307
        %309 = vmatprep.subr.mxu0 0.0
        %v310 = vand.u32 %v247, 4294901760
        %311 = vmatpush1.xpose.msra.mxu0 %v310
        %312 = vmatprep.subr.mxu0 0.0
        %v313 = vand.u32 %v246, 4294901760
        %314 = vmatpush1.xpose.msra.mxu0 %v313
        %315 = vmatprep.subr.mxu0 0.0
        %316 = vmatpush2.xpose.msra.mxu0 0.0
        %317 = vmatprep.subr.mxu0 0.0
        %318 = vmatpush2.xpose.msra.mxu0 0.0
        %319 = vmatprep.subr.mxu0 0.0
        %320 = vmatpush2.xpose.msra.mxu0 0.0
        %321 = vmatprep.subr.mxu0 0.0
        %322 = vmatpush2.xpose.msra.mxu0 0.0
        %323 = vmatprep.subr.mxu0 0.0
        %324 = vmatpush2.xpose.msra.mxu0 0.0
        %325 = vmatprep.subr.mxu0 0.0
        %326 = vmatpush2.xpose.msra.mxu0 0.0
        %327 = vmatprep.subr.mxu0 0.0
        %328 = vmatpush2.xpose.msra.mxu0 0.0
        %329 = vmatprep.subr.mxu0 0.0
        %330 = vmatpush2.xpose.msra.mxu0 0.0
        %331 = vmatprep.subr.mxu0 0.0
        %332 = vmatpush2.xpose.msra.mxu0 0.0
        %333 = vmatprep.subr.mxu0 0.0
        %334 = vmatpush2.xpose.msra.mxu0 0.0
        %335 = vmatprep.subr.mxu0 0.0
        %336 = vmatpush2.xpose.msra.mxu0 0.0
        %337 = vmatprep.subr.mxu0 0.0
        %338 = vmatpush2.xpose.msra.mxu0 0.0
        %339 = vmatprep.subr.mxu0 0.0
        %340 = vmatpush2.xpose.msra.mxu0 0.0
        %341 = vmatprep.subr.mxu0 0.0
        %342 = vmatpush2.xpose.msra.mxu0 0.0
        %343 = vmatprep.subr.mxu0 0.0
        %344 = vmatpush2.xpose.msra.mxu0 0.0
        %345 = vmatprep.subr.mxu0 0.0
        %346 = vmatpush2.xpose.msra.mxu0 0.0
        %347 = vmatprep.mubr.f32.mxu0 0.0
        %v348 = vand.u32 %v245, 4294901760
        %v349 = vsub.f32 %v245, %v348
        %v350 = vand.u32 %v349, 4294901760
        %v351 = vsub.f32 %v349, %v350
        %v352 = vand.u32 %v351, 4294901760
        %353 = vmatmul.mubr.f32.gmra.mxu0 %v352
        %v354 = vpop.f32.mrf.mxu0
        %v355 = vadd.f32 %v266, %v354
        %v356 = vpop.f32.mrf.mxu0
        %357 = vdwg.mxu0
        %358 = vmatprep.subr.mxu0 0.0
        %v359 = vand.u32 %v261, 4294901760
        %v360 = vsub.f32 %v261, %v359
        %v361 = vand.u32 %v360, 4294901760
        %v362 = vsub.f32 %v360, %v361
        %v363 = vand.u32 %v362, 4294901760
        %364 = vmatpush1.xpose.msra.mxu0 %v363
        %365 = vmatprep.subr.mxu0 0.0
        %v366 = vand.u32 %v260, 4294901760
        %v367 = vsub.f32 %v260, %v366
        %v368 = vand.u32 %v367, 4294901760
        %v369 = vsub.f32 %v367, %v368
        %v370 = vand.u32 %v369, 4294901760
        %371 = vmatpush1.xpose.msra.mxu0 %v370
        %372 = vmatprep.subr.mxu0 0.0
        %v373 = vand.u32 %v259, 4294901760
        %v374 = vsub.f32 %v259, %v373
        %v375 = vand.u32 %v374, 4294901760
        %v376 = vsub.f32 %v374, %v375
        %v377 = vand.u32 %v376, 4294901760
        %378 = vmatpush1.xpose.msra.mxu0 %v377
        %379 = vmatprep.subr.mxu0 0.0
        %v380 = vand.u32 %v258, 4294901760
        %v381 = vsub.f32 %v258, %v380
        %v382 = vand.u32 %v381, 4294901760
        %v383 = vsub.f32 %v381, %v382
        %v384 = vand.u32 %v383, 4294901760
        %385 = vmatpush1.xpose.msra.mxu0 %v384
        %386 = vmatprep.subr.mxu0 0.0
        %v387 = vand.u32 %v257, 4294901760
        %v388 = vsub.f32 %v257, %v387
        %v389 = vand.u32 %v388, 4294901760
        %v390 = vsub.f32 %v388, %v389
        %v391 = vand.u32 %v390, 4294901760
        %392 = vmatpush1.xpose.msra.mxu0 %v391
        %393 = vmatprep.subr.mxu0 0.0
        %v394 = vand.u32 %v256, 4294901760
        %v395 = vsub.f32 %v256, %v394
        %v396 = vand.u32 %v395, 4294901760
        %v397 = vsub.f32 %v395, %v396
        %v398 = vand.u32 %v397, 4294901760
        %399 = vmatpush1.xpose.msra.mxu0 %v398
        %400 = vmatprep.subr.mxu0 0.0
        %v401 = vand.u32 %v255, 4294901760
        %v402 = vsub.f32 %v255, %v401
        %v403 = vand.u32 %v402, 4294901760
        %v404 = vsub.f32 %v402, %v403
        %v405 = vand.u32 %v404, 4294901760
        %406 = vmatpush1.xpose.msra.mxu0 %v405
        %407 = vmatprep.subr.mxu0 0.0
        %v408 = vand.u32 %v254, 4294901760
        %v409 = vsub.f32 %v254, %v408
        %v410 = vand.u32 %v409, 4294901760
        %v411 = vsub.f32 %v409, %v410
        %v412 = vand.u32 %v411, 4294901760
        %413 = vmatpush1.xpose.msra.mxu0 %v412
        %414 = vmatprep.subr.mxu0 0.0
        %v415 = vand.u32 %v253, 4294901760
        %v416 = vsub.f32 %v253, %v415
        %v417 = vand.u32 %v416, 4294901760
        %v418 = vsub.f32 %v416, %v417
        %v419 = vand.u32 %v418, 4294901760
        %420 = vmatpush1.xpose.msra.mxu0 %v419
        %421 = vmatprep.subr.mxu0 0.0
        %v422 = vand.u32 %v252, 4294901760
        %v423 = vsub.f32 %v252, %v422
        %v424 = vand.u32 %v423, 4294901760
        %v425 = vsub.f32 %v423, %v424
        %v426 = vand.u32 %v425, 4294901760
        %427 = vmatpush1.xpose.msra.mxu0 %v426
        %428 = vmatprep.subr.mxu0 0.0
        %v429 = vand.u32 %v251, 4294901760
        %v430 = vsub.f32 %v251, %v429
        %v431 = vand.u32 %v430, 4294901760
        %v432 = vsub.f32 %v430, %v431
        %v433 = vand.u32 %v432, 4294901760
        %434 = vmatpush1.xpose.msra.mxu0 %v433
        %435 = vmatprep.subr.mxu0 0.0
        %v436 = vand.u32 %v250, 4294901760
        %v437 = vsub.f32 %v250, %v436
        %v438 = vand.u32 %v437, 4294901760
        %v439 = vsub.f32 %v437, %v438
        %v440 = vand.u32 %v439, 4294901760
        %441 = vmatpush1.xpose.msra.mxu0 %v440
        %442 = vmatprep.subr.mxu0 0.0
        %v443 = vand.u32 %v249, 4294901760
        %v444 = vsub.f32 %v249, %v443
        %v445 = vand.u32 %v444, 4294901760
        %v446 = vsub.f32 %v444, %v445
        %v447 = vand.u32 %v446, 4294901760
        %448 = vmatpush1.xpose.msra.mxu0 %v447
        %449 = vmatprep.subr.mxu0 0.0
        %v450 = vand.u32 %v248, 4294901760
        %v451 = vsub.f32 %v248, %v450
        %v452 = vand.u32 %v451, 4294901760
        %v453 = vsub.f32 %v451, %v452
        %v454 = vand.u32 %v453, 4294901760
        %455 = vmatpush1.xpose.msra.mxu0 %v454
        %456 = vmatprep.subr.mxu0 0.0
        %v457 = vand.u32 %v247, 4294901760
        %v458 = vsub.f32 %v247, %v457
        %v459 = vand.u32 %v458, 4294901760
        %v460 = vsub.f32 %v458, %v459
        %v461 = vand.u32 %v460, 4294901760
        %462 = vmatpush1.xpose.msra.mxu0 %v461
        %463 = vmatprep.subr.mxu0 0.0
        %v464 = vand.u32 %v246, 4294901760
        %v465 = vsub.f32 %v246, %v464
        %v466 = vand.u32 %v465, 4294901760
        %v467 = vsub.f32 %v465, %v466
        %v468 = vand.u32 %v467, 4294901760
        %469 = vmatpush1.xpose.msra.mxu0 %v468
        %470 = vmatprep.subr.mxu0 0.0
        %471 = vmatpush2.xpose.msra.mxu0 0.0
        %472 = vmatprep.subr.mxu0 0.0
        %473 = vmatpush2.xpose.msra.mxu0 0.0
        %474 = vmatprep.subr.mxu0 0.0
        %475 = vmatpush2.xpose.msra.mxu0 0.0
        %476 = vmatprep.subr.mxu0 0.0
        %477 = vmatpush2.xpose.msra.mxu0 0.0
        %478 = vmatprep.subr.mxu0 0.0
        %479 = vmatpush2.xpose.msra.mxu0 0.0
        %480 = vmatprep.subr.mxu0 0.0
        %481 = vmatpush2.xpose.msra.mxu0 0.0
        %482 = vmatprep.subr.mxu0 0.0
        %483 = vmatpush2.xpose.msra.mxu0 0.0
        %484 = vmatprep.subr.mxu0 0.0
        %485 = vmatpush2.xpose.msra.mxu0 0.0
        %486 = vmatprep.subr.mxu0 0.0
        %487 = vmatpush2.xpose.msra.mxu0 0.0
        %488 = vmatprep.subr.mxu0 0.0
        %489 = vmatpush2.xpose.msra.mxu0 0.0
        %490 = vmatprep.subr.mxu0 0.0
        %491 = vmatpush2.xpose.msra.mxu0 0.0
        %492 = vmatprep.subr.mxu0 0.0
        %493 = vmatpush2.xpose.msra.mxu0 0.0
        %494 = vmatprep.subr.mxu0 0.0
        %495 = vmatpush2.xpose.msra.mxu0 0.0
        %496 = vmatprep.subr.mxu0 0.0
        %497 = vmatpush2.xpose.msra.mxu0 0.0
        %498 = vmatprep.subr.mxu0 0.0
        %499 = vmatpush2.xpose.msra.mxu0 0.0
        %500 = vmatprep.subr.mxu0 0.0
        %501 = vmatpush2.xpose.msra.mxu0 0.0
        %502 = vmatprep.mubr.f32.mxu0 0.0
        %v503 = vand.u32 %v245, 4294901760
        %504 = vmatmul.mubr.f32.gmra.mxu0 %v503
        %v505 = vpop.f32.mrf.mxu0
        %v506 = vadd.f32 %v355, %v505
        %v507 = vpop.f32.mrf.mxu0
        %508 = vdwg.mxu0
        %509 = vmatprep.subr.mxu0 0.0
        %v510 = vand.u32 %v261, 4294901760
        %v511 = vsub.f32 %v261, %v510
        %512 = vmatpush1.xpose.msra.mxu0 %v511
        %513 = vmatprep.subr.mxu0 0.0
        %v514 = vand.u32 %v260, 4294901760
        %v515 = vsub.f32 %v260, %v514
        %516 = vmatpush1.xpose.msra.mxu0 %v515
        %517 = vmatprep.subr.mxu0 0.0
        %v518 = vand.u32 %v259, 4294901760
        %v519 = vsub.f32 %v259, %v518
        %520 = vmatpush1.xpose.msra.mxu0 %v519
        %521 = vmatprep.subr.mxu0 0.0
        %v522 = vand.u32 %v258, 4294901760
        %v523 = vsub.f32 %v258, %v522
        %524 = vmatpush1.xpose.msra.mxu0 %v523
        %525 = vmatprep.subr.mxu0 0.0
        %v526 = vand.u32 %v257, 4294901760
        %v527 = vsub.f32 %v257, %v526
        %528 = vmatpush1.xpose.msra.mxu0 %v527
        %529 = vmatprep.subr.mxu0 0.0
        %v530 = vand.u32 %v256, 4294901760
        %v531 = vsub.f32 %v256, %v530
        %532 = vmatpush1.xpose.msra.mxu0 %v531
        %533 = vmatprep.subr.mxu0 0.0
        %v534 = vand.u32 %v255, 4294901760
        %v535 = vsub.f32 %v255, %v534
        %536 = vmatpush1.xpose.msra.mxu0 %v535
        %537 = vmatprep.subr.mxu0 0.0
        %v538 = vand.u32 %v254, 4294901760
        %v539 = vsub.f32 %v254, %v538
        %540 = vmatpush1.xpose.msra.mxu0 %v539
        %541 = vmatprep.subr.mxu0 0.0
        %v542 = vand.u32 %v253, 4294901760
        %v543 = vsub.f32 %v253, %v542
        %544 = vmatpush1.xpose.msra.mxu0 %v543
        %545 = vmatprep.subr.mxu0 0.0
        %v546 = vand.u32 %v252, 4294901760
        %v547 = vsub.f32 %v252, %v546
        %548 = vmatpush1.xpose.msra.mxu0 %v547
        %549 = vmatprep.subr.mxu0 0.0
        %v550 = vand.u32 %v251, 4294901760
        %v551 = vsub.f32 %v251, %v550
        %552 = vmatpush1.xpose.msra.mxu0 %v551
        %553 = vmatprep.subr.mxu0 0.0
        %v554 = vand.u32 %v250, 4294901760
        %v555 = vsub.f32 %v250, %v554
        %556 = vmatpush1.xpose.msra.mxu0 %v555
        %557 = vmatprep.subr.mxu0 0.0
        %v558 = vand.u32 %v249, 4294901760
        %v559 = vsub.f32 %v249, %v558
        %560 = vmatpush1.xpose.msra.mxu0 %v559
        %561 = vmatprep.subr.mxu0 0.0
        %v562 = vand.u32 %v248, 4294901760
        %v563 = vsub.f32 %v248, %v562
        %564 = vmatpush1.xpose.msra.mxu0 %v563
        %565 = vmatprep.subr.mxu0 0.0
        %v566 = vand.u32 %v247, 4294901760
        %v567 = vsub.f32 %v247, %v566
        %568 = vmatpush1.xpose.msra.mxu0 %v567
        %569 = vmatprep.subr.mxu0 0.0
        %v570 = vand.u32 %v246, 4294901760
        %v571 = vsub.f32 %v246, %v570
        %572 = vmatpush1.xpose.msra.mxu0 %v571
        %573 = vmatprep.subr.mxu0 0.0
        %574 = vmatpush2.xpose.msra.mxu0 0.0
        %575 = vmatprep.subr.mxu0 0.0
        %576 = vmatpush2.xpose.msra.mxu0 0.0
        %577 = vmatprep.subr.mxu0 0.0
        %578 = vmatpush2.xpose.msra.mxu0 0.0
        %579 = vmatprep.subr.mxu0 0.0
        %580 = vmatpush2.xpose.msra.mxu0 0.0
        %581 = vmatprep.subr.mxu0 0.0
        %582 = vmatpush2.xpose.msra.mxu0 0.0
        %583 = vmatprep.subr.mxu0 0.0
        %584 = vmatpush2.xpose.msra.mxu0 0.0
        %585 = vmatprep.subr.mxu0 0.0
        %586 = vmatpush2.xpose.msra.mxu0 0.0
        %587 = vmatprep.subr.mxu0 0.0
        %588 = vmatpush2.xpose.msra.mxu0 0.0
        %589 = vmatprep.subr.mxu0 0.0
        %590 = vmatpush2.xpose.msra.mxu0 0.0
        %591 = vmatprep.subr.mxu0 0.0
        %592 = vmatpush2.xpose.msra.mxu0 0.0
        %593 = vmatprep.subr.mxu0 0.0
        %594 = vmatpush2.xpose.msra.mxu0 0.0
        %595 = vmatprep.subr.mxu0 0.0
        %596 = vmatpush2.xpose.msra.mxu0 0.0
        %597 = vmatprep.subr.mxu0 0.0
        %598 = vmatpush2.xpose.msra.mxu0 0.0
        %599 = vmatprep.subr.mxu0 0.0
        %600 = vmatpush2.xpose.msra.mxu0 0.0
        %601 = vmatprep.subr.mxu0 0.0
        %602 = vmatpush2.xpose.msra.mxu0 0.0
        %603 = vmatprep.subr.mxu0 0.0
        %604 = vmatpush2.xpose.msra.mxu0 0.0
        %605 = vmatprep.mubr.f32.mxu0 0.0
        %v606 = vand.u32 %v245, 4294901760
        %v607 = vsub.f32 %v245, %v606
        %608 = vmatmul.mubr.f32.gmra.mxu0 %v607
        %v609 = vpop.f32.mrf.mxu0
        %v610 = vadd.f32 %v506, %v609
        %v611 = vpop.f32.mrf.mxu0
        %612 = vdwg.mxu0
        %613 = vmatprep.subr.mxu0 0.0
        %v614 = vand.u32 %v261, 4294901760
        %615 = vmatpush1.xpose.msra.mxu0 %v614
        %616 = vmatprep.subr.mxu0 0.0
        %v617 = vand.u32 %v260, 4294901760
        %618 = vmatpush1.xpose.msra.mxu0 %v617
        %619 = vmatprep.subr.mxu0 0.0
        %v620 = vand.u32 %v259, 4294901760
        %621 = vmatpush1.xpose.msra.mxu0 %v620
        %622 = vmatprep.subr.mxu0 0.0
        %v623 = vand.u32 %v258, 4294901760
        %624 = vmatpush1.xpose.msra.mxu0 %v623
        %625 = vmatprep.subr.mxu0 0.0
        %v626 = vand.u32 %v257, 4294901760
        %627 = vmatpush1.xpose.msra.mxu0 %v626
        %628 = vmatprep.subr.mxu0 0.0
        %v629 = vand.u32 %v256, 4294901760
        %630 = vmatpush1.xpose.msra.mxu0 %v629
        %631 = vmatprep.subr.mxu0 0.0
        %v632 = vand.u32 %v255, 4294901760
        %633 = vmatpush1.xpose.msra.mxu0 %v632
        %634 = vmatprep.subr.mxu0 0.0
        %v635 = vand.u32 %v254, 4294901760
        %636 = vmatpush1.xpose.msra.mxu0 %v635
        %637 = vmatprep.subr.mxu0 0.0
        %v638 = vand.u32 %v253, 4294901760
        %639 = vmatpush1.xpose.msra.mxu0 %v638
        %640 = vmatprep.subr.mxu0 0.0
        %v641 = vand.u32 %v252, 4294901760
        %642 = vmatpush1.xpose.msra.mxu0 %v641
        %643 = vmatprep.subr.mxu0 0.0
        %v644 = vand.u32 %v251, 4294901760
        %645 = vmatpush1.xpose.msra.mxu0 %v644
        %646 = vmatprep.subr.mxu0 0.0
        %v647 = vand.u32 %v250, 4294901760
        %648 = vmatpush1.xpose.msra.mxu0 %v647
        %649 = vmatprep.subr.mxu0 0.0
        %v650 = vand.u32 %v249, 4294901760
        %651 = vmatpush1.xpose.msra.mxu0 %v650
        %652 = vmatprep.subr.mxu0 0.0
        %v653 = vand.u32 %v248, 4294901760
        %654 = vmatpush1.xpose.msra.mxu0 %v653
        %655 = vmatprep.subr.mxu0 0.0
        %v656 = vand.u32 %v247, 4294901760
        %657 = vmatpush1.xpose.msra.mxu0 %v656
        %658 = vmatprep.subr.mxu0 0.0
        %v659 = vand.u32 %v246, 4294901760
        %660 = vmatpush1.xpose.msra.mxu0 %v659
        %661 = vmatprep.subr.mxu0 0.0
        %662 = vmatpush2.xpose.msra.mxu0 0.0
        %663 = vmatprep.subr.mxu0 0.0
        %664 = vmatpush2.xpose.msra.mxu0 0.0
        %665 = vmatprep.subr.mxu0 0.0
        %666 = vmatpush2.xpose.msra.mxu0 0.0
        %667 = vmatprep.subr.mxu0 0.0
        %668 = vmatpush2.xpose.msra.mxu0 0.0
        %669 = vmatprep.subr.mxu0 0.0
        %670 = vmatpush2.xpose.msra.mxu0 0.0
        %671 = vmatprep.subr.mxu0 0.0
        %672 = vmatpush2.xpose.msra.mxu0 0.0
        %673 = vmatprep.subr.mxu0 0.0
        %674 = vmatpush2.xpose.msra.mxu0 0.0
        %675 = vmatprep.subr.mxu0 0.0
        %676 = vmatpush2.xpose.msra.mxu0 0.0
        %677 = vmatprep.subr.mxu0 0.0
        %678 = vmatpush2.xpose.msra.mxu0 0.0
        %679 = vmatprep.subr.mxu0 0.0
        %680 = vmatpush2.xpose.msra.mxu0 0.0
        %681 = vmatprep.subr.mxu0 0.0
        %682 = vmatpush2.xpose.msra.mxu0 0.0
        %683 = vmatprep.subr.mxu0 0.0
        %684 = vmatpush2.xpose.msra.mxu0 0.0
        %685 = vmatprep.subr.mxu0 0.0
        %686 = vmatpush2.xpose.msra.mxu0 0.0
        %687 = vmatprep.subr.mxu0 0.0
        %688 = vmatpush2.xpose.msra.mxu0 0.0
        %689 = vmatprep.subr.mxu0 0.0
        %690 = vmatpush2.xpose.msra.mxu0 0.0
        %691 = vmatprep.subr.mxu0 0.0
        %692 = vmatpush2.xpose.msra.mxu0 0.0
        %693 = vmatprep.mubr.f32.mxu0 0.0
        %v694 = vand.u32 %v245, 4294901760
        %v695 = vsub.f32 %v245, %v694
        %v696 = vand.u32 %v695, 4294901760
        %697 = vmatmul.mubr.f32.gmra.mxu0 %v696
        %v698 = vpop.f32.mrf.mxu0
        %v699 = vadd.f32 %v610, %v698
        %v700 = vpop.f32.mrf.mxu0
        %701 = vdwg.mxu0
        %702 = vmatprep.subr.mxu0 0.0
        %v703 = vand.u32 %v261, 4294901760
        %v704 = vsub.f32 %v261, %v703
        %v705 = vand.u32 %v704, 4294901760
        %706 = vmatpush1.xpose.msra.mxu0 %v705
        %707 = vmatprep.subr.mxu0 0.0
        %v708 = vand.u32 %v260, 4294901760
        %v709 = vsub.f32 %v260, %v708
        %v710 = vand.u32 %v709, 4294901760
        %711 = vmatpush1.xpose.msra.mxu0 %v710
        %712 = vmatprep.subr.mxu0 0.0
        %v713 = vand.u32 %v259, 4294901760
        %v714 = vsub.f32 %v259, %v713
        %v715 = vand.u32 %v714, 4294901760
        %716 = vmatpush1.xpose.msra.mxu0 %v715
        %717 = vmatprep.subr.mxu0 0.0
        %v718 = vand.u32 %v258, 4294901760
        %v719 = vsub.f32 %v258, %v718
        %v720 = vand.u32 %v719, 4294901760
        %721 = vmatpush1.xpose.msra.mxu0 %v720
        %722 = vmatprep.subr.mxu0 0.0
        %v723 = vand.u32 %v257, 4294901760
        %v724 = vsub.f32 %v257, %v723
        %v725 = vand.u32 %v724, 4294901760
        %726 = vmatpush1.xpose.msra.mxu0 %v725
        %727 = vmatprep.subr.mxu0 0.0
        %v728 = vand.u32 %v256, 4294901760
        %v729 = vsub.f32 %v256, %v728
        %v730 = vand.u32 %v729, 4294901760
        %731 = vmatpush1.xpose.msra.mxu0 %v730
        %732 = vmatprep.subr.mxu0 0.0
        %v733 = vand.u32 %v255, 4294901760
        %v734 = vsub.f32 %v255, %v733
        %v735 = vand.u32 %v734, 4294901760
        %736 = vmatpush1.xpose.msra.mxu0 %v735
        %737 = vmatprep.subr.mxu0 0.0
        %v738 = vand.u32 %v254, 4294901760
        %v739 = vsub.f32 %v254, %v738
        %v740 = vand.u32 %v739, 4294901760
        %741 = vmatpush1.xpose.msra.mxu0 %v740
        %742 = vmatprep.subr.mxu0 0.0
        %v743 = vand.u32 %v253, 4294901760
        %v744 = vsub.f32 %v253, %v743
        %v745 = vand.u32 %v744, 4294901760
        %746 = vmatpush1.xpose.msra.mxu0 %v745
        %747 = vmatprep.subr.mxu0 0.0
        %v748 = vand.u32 %v252, 4294901760
        %v749 = vsub.f32 %v252, %v748
        %v750 = vand.u32 %v749, 4294901760
        %751 = vmatpush1.xpose.msra.mxu0 %v750
        %752 = vmatprep.subr.mxu0 0.0
        %v753 = vand.u32 %v251, 4294901760
        %v754 = vsub.f32 %v251, %v753
        %v755 = vand.u32 %v754, 4294901760
        %756 = vmatpush1.xpose.msra.mxu0 %v755
        %757 = vmatprep.subr.mxu0 0.0
        %v758 = vand.u32 %v250, 4294901760
        %v759 = vsub.f32 %v250, %v758
        %v760 = vand.u32 %v759, 4294901760
        %761 = vmatpush1.xpose.msra.mxu0 %v760
        %762 = vmatprep.subr.mxu0 0.0
        %v763 = vand.u32 %v249, 4294901760
        %v764 = vsub.f32 %v249, %v763
        %v765 = vand.u32 %v764, 4294901760
        %766 = vmatpush1.xpose.msra.mxu0 %v765
        %767 = vmatprep.subr.mxu0 0.0
        %v768 = vand.u32 %v248, 4294901760
        %v769 = vsub.f32 %v248, %v768
        %v770 = vand.u32 %v769, 4294901760
        %771 = vmatpush1.xpose.msra.mxu0 %v770
        %772 = vmatprep.subr.mxu0 0.0
        %v773 = vand.u32 %v247, 4294901760
        %v774 = vsub.f32 %v247, %v773
        %v775 = vand.u32 %v774, 4294901760
        %776 = vmatpush1.xpose.msra.mxu0 %v775
        %777 = vmatprep.subr.mxu0 0.0
        %v778 = vand.u32 %v246, 4294901760
        %v779 = vsub.f32 %v246, %v778
        %v780 = vand.u32 %v779, 4294901760
        %781 = vmatpush1.xpose.msra.mxu0 %v780
        %782 = vmatprep.subr.mxu0 0.0
        %783 = vmatpush2.xpose.msra.mxu0 0.0
        %784 = vmatprep.subr.mxu0 0.0
        %785 = vmatpush2.xpose.msra.mxu0 0.0
        %786 = vmatprep.subr.mxu0 0.0
        %787 = vmatpush2.xpose.msra.mxu0 0.0
        %788 = vmatprep.subr.mxu0 0.0
        %789 = vmatpush2.xpose.msra.mxu0 0.0
        %790 = vmatprep.subr.mxu0 0.0
        %791 = vmatpush2.xpose.msra.mxu0 0.0
        %792 = vmatprep.subr.mxu0 0.0
        %793 = vmatpush2.xpose.msra.mxu0 0.0
        %794 = vmatprep.subr.mxu0 0.0
        %795 = vmatpush2.xpose.msra.mxu0 0.0
        %796 = vmatprep.subr.mxu0 0.0
        %797 = vmatpush2.xpose.msra.mxu0 0.0
        %798 = vmatprep.subr.mxu0 0.0
        %799 = vmatpush2.xpose.msra.mxu0 0.0
        %800 = vmatprep.subr.mxu0 0.0
        %801 = vmatpush2.xpose.msra.mxu0 0.0
        %802 = vmatprep.subr.mxu0 0.0
        %803 = vmatpush2.xpose.msra.mxu0 0.0
        %804 = vmatprep.subr.mxu0 0.0
        %805 = vmatpush2.xpose.msra.mxu0 0.0
        %806 = vmatprep.subr.mxu0 0.0
        %807 = vmatpush2.xpose.msra.mxu0 0.0
        %808 = vmatprep.subr.mxu0 0.0
        %809 = vmatpush2.xpose.msra.mxu0 0.0
        %810 = vmatprep.subr.mxu0 0.0
        %811 = vmatpush2.xpose.msra.mxu0 0.0
        %812 = vmatprep.subr.mxu0 0.0
        %813 = vmatpush2.xpose.msra.mxu0 0.0
        %814 = vmatprep.mubr.f32.mxu0 0.0
        %v815 = vand.u32 %v245, 4294901760
        %816 = vmatmul.mubr.f32.gmra.mxu0 %v815
        %v817 = vpop.f32.mrf.mxu0
        %v818 = vadd.f32 %v699, %v817
        %v819 = vpop.f32.mrf.mxu0
        %820 = vdwg.mxu0
        %821 = vmatprep.subr.mxu0 0.0
        %v822 = vand.u32 %v261, 4294901760
        %823 = vmatpush1.xpose.msra.mxu0 %v822
        %824 = vmatprep.subr.mxu0 0.0
        %v825 = vand.u32 %v260, 4294901760
        %826 = vmatpush1.xpose.msra.mxu0 %v825
        %827 = vmatprep.subr.mxu0 0.0
        %v828 = vand.u32 %v259, 4294901760
        %829 = vmatpush1.xpose.msra.mxu0 %v828
        %830 = vmatprep.subr.mxu0 0.0
        %v831 = vand.u32 %v258, 4294901760
        %832 = vmatpush1.xpose.msra.mxu0 %v831
        %833 = vmatprep.subr.mxu0 0.0
        %v834 = vand.u32 %v257, 4294901760
        %835 = vmatpush1.xpose.msra.mxu0 %v834
        %836 = vmatprep.subr.mxu0 0.0
        %v837 = vand.u32 %v256, 4294901760
        %838 = vmatpush1.xpose.msra.mxu0 %v837
        %839 = vmatprep.subr.mxu0 0.0
        %v840 = vand.u32 %v255, 4294901760
        %841 = vmatpush1.xpose.msra.mxu0 %v840
        %842 = vmatprep.subr.mxu0 0.0
        %v843 = vand.u32 %v254, 4294901760
        %844 = vmatpush1.xpose.msra.mxu0 %v843
        %845 = vmatprep.subr.mxu0 0.0
        %v846 = vand.u32 %v253, 4294901760
        %847 = vmatpush1.xpose.msra.mxu0 %v846
        %848 = vmatprep.subr.mxu0 0.0
        %v849 = vand.u32 %v252, 4294901760
        %850 = vmatpush1.xpose.msra.mxu0 %v849
        %851 = vmatprep.subr.mxu0 0.0
        %v852 = vand.u32 %v251, 4294901760
        %853 = vmatpush1.xpose.msra.mxu0 %v852
        %854 = vmatprep.subr.mxu0 0.0
        %v855 = vand.u32 %v250, 4294901760
        %856 = vmatpush1.xpose.msra.mxu0 %v855
        %857 = vmatprep.subr.mxu0 0.0
        %v858 = vand.u32 %v249, 4294901760
        %859 = vmatpush1.xpose.msra.mxu0 %v858
        %860 = vmatprep.subr.mxu0 0.0
        %v861 = vand.u32 %v248, 4294901760
        %862 = vmatpush1.xpose.msra.mxu0 %v861
        %863 = vmatprep.subr.mxu0 0.0
        %v864 = vand.u32 %v247, 4294901760
        %865 = vmatpush1.xpose.msra.mxu0 %v864
        %866 = vmatprep.subr.mxu0 0.0
        %v867 = vand.u32 %v246, 4294901760
        %868 = vmatpush1.xpose.msra.mxu0 %v867
        %869 = vmatprep.subr.mxu0 0.0
        %870 = vmatpush2.xpose.msra.mxu0 0.0
        %871 = vmatprep.subr.mxu0 0.0
        %872 = vmatpush2.xpose.msra.mxu0 0.0
        %873 = vmatprep.subr.mxu0 0.0
        %874 = vmatpush2.xpose.msra.mxu0 0.0
        %875 = vmatprep.subr.mxu0 0.0
        %876 = vmatpush2.xpose.msra.mxu0 0.0
        %877 = vmatprep.subr.mxu0 0.0
        %878 = vmatpush2.xpose.msra.mxu0 0.0
        %879 = vmatprep.subr.mxu0 0.0
        %880 = vmatpush2.xpose.msra.mxu0 0.0
        %881 = vmatprep.subr.mxu0 0.0
        %882 = vmatpush2.xpose.msra.mxu0 0.0
        %883 = vmatprep.subr.mxu0 0.0
        %884 = vmatpush2.xpose.msra.mxu0 0.0
        %885 = vmatprep.subr.mxu0 0.0
        %886 = vmatpush2.xpose.msra.mxu0 0.0
        %887 = vmatprep.subr.mxu0 0.0
        %888 = vmatpush2.xpose.msra.mxu0 0.0
        %889 = vmatprep.subr.mxu0 0.0
        %890 = vmatpush2.xpose.msra.mxu0 0.0
        %891 = vmatprep.subr.mxu0 0.0
        %892 = vmatpush2.xpose.msra.mxu0 0.0
        %893 = vmatprep.subr.mxu0 0.0
        %894 = vmatpush2.xpose.msra.mxu0 0.0
        %895 = vmatprep.subr.mxu0 0.0
        %896 = vmatpush2.xpose.msra.mxu0 0.0
        %897 = vmatprep.subr.mxu0 0.0
        %898 = vmatpush2.xpose.msra.mxu0 0.0
        %899 = vmatprep.subr.mxu0 0.0
        %900 = vmatpush2.xpose.msra.mxu0 0.0
        %901 = vmatprep.mubr.f32.mxu0 0.0
        %v902 = vand.u32 %v245, 4294901760
        %903 = vmatmul.mubr.f32.gmra.mxu0 %v902
        %v904 = vpop.f32.mrf.mxu0
        %v905 = vadd.f32 %v818, %v904
        %v906 = vpop.f32.mrf.mxu0
        %907 = vdwg.mxu0
        %v908 = vld [vmem:[%s208] sm:$0xff]
        %v909 = vadd.f32 %v905, %v908
        %910 = vadd.xlane.f32.xlu0 %v909
        %v911 = vpop.xlane.xlu0 %910
        %v912 = vrcp.pop 128.0
        %v913 = vmul.f32 %v911, %v912
        %v914 = vsub.f32 %v909, %v913
        %v915 = vmul.f32 %v914, %v914
        %916 = vadd.xlane.f32.xlu0 %v915
        %v917 = vpop.xlane.xlu0 %916
        %v918 = vmul.f32 %v917, %v912
        %v919 = vadd.f32 %v918, 1e-12
        %v920 = vrsqrt.pop %v919
        %v921 = vmul.f32 %v914, %v920
        %v922 = vlaneseq
        %v923 = vshrl.u32 %v922, 7
        %v924 = vsub.s32 1, %v923
        %v925 = vrot.slane %v262, %v924
        %v926 = vmul.f32 %v921, %v925
        %v927 = vlaneseq
        %v928 = vshrl.u32 %v927, 7
        %v929 = vsub.s32 2, %v928
        %v930 = vrot.slane %v262, %v929
        %v931 = vadd.f32 %v926, %v930
        %932 = vst [vmem:[%s240] sm:$0xff] %v931
        %s933 = sand.u32 %s124, 1
        %s934 = scalar_lea.sflag [#allocation4], %s933
        %s935 = sand.u32 %s124, 1
        %s936 = smul.addr %s935, 8
        %s937 = scalar_lea.vmem [#allocation7], %s936
        // Predicated region
        $region45: #{bert_cross_output.1} parent=35 // pred_check
          %p938 = pneg %p134
        $region46: #{bert_cross_output.1} parent=35 // pred_check_branch
          %940 = sbr.rel (%p938) target = $region48
        $region47: #{bert_cross_output.1} parent=35 // pred_region
          %s942 = ssub.s32 128, 128
          %943 = vsyncadd %s934, %s942
          %s944 = smul.addr %s22, 128
          %s945 = scalar_lea.hbm %s4, %s944
          %s947 = sshll.u32 %s937, 4
          %s948 = int_to_ptr.vmem [resolvable:$true] %s947
          %950 = dma.vmem_to_hbm [thread:$0]  %s948, 128, %s945, %s934
        $region48: #{bert_cross_output.1} parent=35 // pred_fallthru
          _
      $region36: #{bert_cross_output.1} parent=5 // pred_fallthru
        _
      %p951 = scmp.le.s32.totalorder 2, %s17
      // Predicated region
      $region49: #{bert_cross_output.1} parent=5 // pred_check
        %p952 = pneg %p951
      $region50: #{bert_cross_output.1} parent=5 // pred_check_branch
        %954 = sbr.rel (%p952) target = $region52
      $region51: #{bert_cross_output.1} parent=5 // pred_region
        %s955 = ssub.s32 %s17, 2
        // Predicated region
        $region53: #{bert_cross_output.1} parent=51 // pred_check
          %p956 = pneg %p140
        $region54: #{bert_cross_output.1} parent=51 // pred_check_branch
          %958 = sbr.rel (%p956) target = $region56
        $region55: #{bert_cross_output.1} parent=51 // pred_region
          %s959 = sand.u32 %s125, 1
          %s960 = scalar_lea.sflag [#allocation4], %s959
          %s961 = sand.u32 %s125, 1
          %s962 = smul.addr %s961, 8
          %s963 = scalar_lea.vmem [#allocation7], %s962
          %964 = dma.done %s960, 128
        $region56: #{bert_cross_output.1} parent=51 // pred_fallthru
          _
      $region52: #{bert_cross_output.1} parent=5 // pred_fallthru
        _
    $region6: #{bert_cross_output.1} parent=1 // loop_footer
      %s21 = sadd.s32 1, %s17
    $region7: #{bert_cross_output.1} parent=1 // loop_footer_branch
      %16 = sbr.rel target = $region3
    $region8: #{bert_cross_output.1} parent=1 // loop_exit
      _
    %965 = vsyncpa [#allocation3], 1
    %s966 = scalar_lea.sflag [#allocation3], 1
    %967 = vsyncpa %s966, 1
    %968 = vsyncpa [#allocation6], 1
    %969 = vsyncpa [#allocation4], 1
    %s970 = scalar_lea.sflag [#allocation4], 1
    %971 = vsyncpa %s970, 1

</llo_original>
